<compile_context>
chip_gen: v7x
topology: tpu7x:2x2x1
jax: 0.10.0
libtpu: 0.0.40
codegen_flags: <defaults>
</compile_context>

<pallas_src>
import functools

import jax
import jax.numpy as jnp
from jax.experimental import pallas as pl
from jax.experimental.pallas import tpu as pltpu


def _round_up(x, m):
    return (x + m - 1) // m * m


def _vmem_limit_bytes():
    """Generation-aware VMEM budget: ~75% of physical capacity."""
    cap = 128 * 1024 * 1024  # v5e/v6e physical
    try:
        info = pltpu.get_tpu_info()
        cap = int(getattr(info, "vmem_capacity_bytes", cap))
    except Exception:
        pass
    return (cap * 3) // 4


def _ff_kernel(x_ref, w1_ref, b1_ref, c_ref, d_ref, w2a_ref, o_ref, *, d_ff, eps):
    # ---- linear_1 + ReLU (MXU + VPU); operands pre-cast in the wrapper ----
    h = jnp.dot(x_ref[...], w1_ref[...], preferred_element_type=jnp.float32)
    h = jnp.maximum(h + b1_ref[...], 0.0)          # padded d_ff lanes are exactly 0

    # ---- Norm statistics over the true d_ff lanes (single-pass mean/var) ----
    s1 = jnp.sum(h, axis=-1, keepdims=True)        # pads contribute 0
    s2 = jnp.sum(h * h, axis=-1, keepdims=True)    # pads contribute 0
    mean = s1 * (1.0 / d_ff)
    var = (s2 - s1 * mean) / (d_ff - 1)            # unbiased (ddof=1), as torch
    var = jnp.maximum(var, 0.0)                    # guard tiny negative rounding
    denom = jnp.sqrt(var) + eps                    # eps added to std, as torch
    inv = pl.reciprocal(denom, approx=True)        # EUP slot, not VALU divide
    inv = inv * (2.0 - denom * inv)                # one Newton step -> ~f32 exact

    # ---- linear_2 with the Norm affine folded through (MXU + small VPU) ----
    #   out = inv * (h @ W2a - mean * c) + d
    y = jnp.dot(h.astype(w2a_ref.dtype), w2a_ref[...],
                preferred_element_type=jnp.float32)
    out = inv * (y - mean * c_ref[...]) + d_ref[...]
    o_ref[...] = out.astype(o_ref.dtype)


def feed_forward(x, params, *, eps=1e-6, tile_m=256, matmul_dtype=jnp.bfloat16):
    """x: (batch, seq, d_model) float32 -> (batch, seq, d_model).

    matmul_dtype=jnp.bfloat16 (default): bf16 MXU operands, f32 accumulation.
    matmul_dtype=None: exact f32 matmuls (matches the torch module bit-closely).
    """
    w1, b1, alpha, beta, w2, b2 = params
    d_model, d_ff = w1.shape
    B, S, D = x.shape
    assert D == d_model
    N = B * S

    # ---- fold the Norm affine (alpha, beta) into the second linear ----
    w2a = alpha.reshape(d_ff, 1) * w2              # diag(alpha) @ W2   (d_ff, d_model)
    c = alpha @ w2                                 # (1, d_model)
    d = beta @ w2 + b2                             # (1, d_model)

    # ---- padded sizes: lane-dense (x128) features, adaptive row tile ----
    d_model_p = _round_up(d_model, 128)
    d_ff_p = _round_up(d_ff, 128)
    tile_m_eff = min(tile_m, _round_up(N, 8))      # don't pad tiny N to 256 rows
    n_pad = _round_up(N, tile_m_eff)

    x2 = jnp.pad(x.reshape(N, d_model),
                 ((0, n_pad - N), (0, d_model_p - d_model)))
    w1p = jnp.pad(w1, ((0, d_model_p - d_model), (0, d_ff_p - d_ff)))
    b1p = jnp.pad(b1, ((0, 0), (0, d_ff_p - d_ff)))
    w2ap = jnp.pad(w2a, ((0, d_ff_p - d_ff), (0, d_model_p - d_model)))
    cp = jnp.pad(c, ((0, 0), (0, d_model_p - d_model)))
    dp = jnp.pad(d, ((0, 0), (0, d_model_p - d_model)))

    # Wrapper-side cast of all matmul operands (grid-invariant weights + x tile):
    # no per-step casts inside the kernel, half the weight DMA/VMEM in bf16 mode.
    if matmul_dtype is not None:
        x2 = x2.astype(matmul_dtype)
        w1p = w1p.astype(matmul_dtype)
        w2ap = w2ap.astype(matmul_dtype)
    # b1p / cp / dp stay f32 (applied on the f32 accumulator path).

    kernel = functools.partial(_ff_kernel, d_ff=d_ff, eps=eps)

    inputs = (x2, w1p, b1p, cp, dp, w2ap)
    flops = 4 * n_pad * d_model_p * d_ff_p + 8 * n_pad * d_ff_p
    bytes_accessed = (sum(int(a.size) * a.dtype.itemsize for a in inputs)
                      + n_pad * d_model_p * jnp.dtype(x.dtype).itemsize)
    cost = pl.CostEstimate(flops=flops, transcendentals=2 * n_pad,
                           bytes_accessed=bytes_accessed)

    out = pl.pallas_call(
        kernel,
        out_shape=jax.ShapeDtypeStruct((n_pad, d_model_p), x.dtype),
        grid_spec=pltpu.PrefetchScalarGridSpec(
            num_scalar_prefetch=0,
            grid=(n_pad // tile_m_eff,),
            in_specs=[
                pl.BlockSpec((tile_m_eff, d_model_p), lambda i: (i, 0)),  # x tile
                pl.BlockSpec((d_model_p, d_ff_p), lambda i: (0, 0)),      # W1
                pl.BlockSpec((1, d_ff_p), lambda i: (0, 0)),              # b1
                pl.BlockSpec((1, d_model_p), lambda i: (0, 0)),           # c = alpha@W2
                pl.BlockSpec((1, d_model_p), lambda i: (0, 0)),           # d = beta@W2+b2
                pl.BlockSpec((d_ff_p, d_model_p), lambda i: (0, 0)),      # W2a
            ],
            out_specs=pl.BlockSpec((tile_m_eff, d_model_p), lambda i: (i, 0)),
        ),
        compiler_params=pltpu.CompilerParams(
            dimension_semantics=("parallel",),
            vmem_limit_bytes=_vmem_limit_bytes()),
        cost_estimate=cost,
    )(*inputs)

    return out[:N, :d_model].reshape(B, S, d_model)


def init_params(key, d_model, d_ff):
    """Deterministic synthetic parameters (shapes match nn.Linear / Norm)."""
    k1, k2, k3, k4 = jax.random.split(key, 4)
    lim1 = 1.0 / jnp.sqrt(d_model)
    lim2 = 1.0 / jnp.sqrt(d_ff)
    # Stored already transposed for row-major x @ W.
    w1 = jax.random.uniform(k1, (d_model, d_ff), jnp.float32, -lim1, lim1)
    b1 = jax.random.uniform(k2, (1, d_ff), jnp.float32, -lim1, lim1)
    w2 = jax.random.uniform(k3, (d_ff, d_model), jnp.float32, -lim2, lim2)
    b2 = jax.random.uniform(k4, (1, d_model), jnp.float32, -lim2, lim2)
    alpha = jnp.ones((1, d_ff), jnp.float32)   # Norm.alpha
    beta = jnp.zeros((1, d_ff), jnp.float32)   # Norm.bias
    return (w1, b1, alpha, beta, w2, b2)


def feed_forward_ref(x, params, eps=1e-6):
    """Pure-JAX reference mirroring the PyTorch forward (eval mode)."""
    w1, b1, alpha, beta, w2, b2 = params
    h = jnp.maximum(x @ w1 + b1, 0.0)
    mean = jnp.mean(h, axis=-1, keepdims=True)
    std = jnp.std(h, axis=-1, keepdims=True, ddof=1)
    n = alpha * (h - mean) / (std + eps) + beta
    return n @ w2 + b2


if __name__ == "__main__":
    d_model, d_ff = 32, 200      # d_ff matches the module default
    batch, seq = 2, 8

    key = jax.random.PRNGKey(0)
    kx, kp = jax.random.split(key)
    x = jax.random.normal(kx, (batch, seq, d_model), jnp.float32)
    params = init_params(kp, d_model, d_ff)
    ref = feed_forward_ref(x, params)

    # Exact f32 MXU mode: matches the torch module to tight tolerance.
    out_f32 = jax.block_until_ready(feed_forward(x, params, matmul_dtype=None))
    assert out_f32.shape == (batch, seq, d_model)
    assert jnp.allclose(out_f32, ref, atol=2e-4, rtol=2e-4)

    # Default (bf16 MXU operands, f32 accumulation): relaxed tolerance due to
    # bf16 rounding of x/W1/h/W2a (documented, expected).
    out_bf16 = jax.block_until_ready(feed_forward(x, params))
    assert out_bf16.shape == (batch, seq, d_model)
    assert jnp.allclose(out_bf16, ref, atol=1e-1, rtol=1e-1)

    print("KERNEL_OK")
</pallas_src>

<mosaic_0001>
module attributes {stable_mosaic.version = 11 : i64} {
  func.func @_ff_kernel(%arg0: i32, %arg1: memref<16x128xf32, #tpu.memory_space<vmem>>, %arg2: memref<128x256xf32, #tpu.memory_space<vmem>>, %arg3: memref<1x256xf32, #tpu.memory_space<vmem>>, %arg4: memref<1x128xf32, #tpu.memory_space<vmem>>, %arg5: memref<1x128xf32, #tpu.memory_space<vmem>>, %arg6: memref<256x128xf32, #tpu.memory_space<vmem>>, %arg7: memref<16x128xf32, #tpu.memory_space<vmem>>) attributes {dimension_semantics = [#tpu.dimension_semantics<parallel>], iteration_bounds = array<i64: 1>, scalar_prefetch = 0 : i64, scratch_operands = 0 : i64, tpu.core_type = #tpu.core_type<tc>, window_params = [{transform_indices = @transform_0, window_bounds = array<i64: 16, 128>}, {pipeline_mode = #tpu.pipeline_mode<synchronous>, transform_indices = @transform_1, window_bounds = array<i64: 128, 256>}, {pipeline_mode = #tpu.pipeline_mode<synchronous>, transform_indices = @transform_2, window_bounds = array<i64: 1, 256>}, {pipeline_mode = #tpu.pipeline_mode<synchronous>, transform_indices = @transform_3, window_bounds = array<i64: 1, 128>}, {pipeline_mode = #tpu.pipeline_mode<synchronous>, transform_indices = @transform_4, window_bounds = array<i64: 1, 128>}, {pipeline_mode = #tpu.pipeline_mode<synchronous>, transform_indices = @transform_5, window_bounds = array<i64: 256, 128>}, {transform_indices = @transform_6, window_bounds = array<i64: 16, 128>}]} {
    %c0 = arith.constant 0 : index
    %c0_0 = arith.constant 0 : index
    %0 = vector.load %arg1[%c0, %c0_0] : memref<16x128xf32, #tpu.memory_space<vmem>>, vector<16x128xf32>
    %c0_1 = arith.constant 0 : index
    %c0_2 = arith.constant 0 : index
    %1 = vector.load %arg2[%c0_1, %c0_2] : memref<128x256xf32, #tpu.memory_space<vmem>>, vector<128x256xf32>
    %cst = arith.constant dense<0.000000e+00> : vector<16x256xf32>
    %2 = tpu.matmul %0, %1, %cst {dimension_numbers = #tpu.dot_dimension_numbers<[1], [0], [0], [1], [0, 0, 1, 1], [], []>} : vector<16x128xf32>, vector<128x256xf32>, vector<16x256xf32> -> vector<16x256xf32>
    %c0_3 = arith.constant 0 : index
    %c0_4 = arith.constant 0 : index
    %3 = vector.load %arg3[%c0_3, %c0_4] : memref<1x256xf32, #tpu.memory_space<vmem>>, vector<1x256xf32>
    %4 = vector.broadcast %3 : vector<1x256xf32> to vector<16x256xf32>
    %5 = arith.addf %2, %4 : vector<16x256xf32>
    %cst_5 = arith.constant 0.000000e+00 : f32
    %6 = vector.broadcast %cst_5 : f32 to vector<16x256xf32>
    %7 = arith.maximumf %5, %6 : vector<16x256xf32>
    %cst_6 = arith.constant dense<0.000000e+00> : vector<16xf32>
    %8 = vector.multi_reduction <add>, %7, %cst_6 [1] : vector<16x256xf32> to vector<16xf32>
    %9 = vector.shape_cast %8 : vector<16xf32> to vector<16x1xf32>
    %10 = arith.mulf %7, %7 : vector<16x256xf32>
    %cst_7 = arith.constant dense<0.000000e+00> : vector<16xf32>
    %11 = vector.multi_reduction <add>, %10, %cst_7 [1] : vector<16x256xf32> to vector<16xf32>
    %12 = vector.shape_cast %11 : vector<16xf32> to vector<16x1xf32>
    %cst_8 = arith.constant 5.000000e-03 : f32
    %13 = vector.broadcast %cst_8 : f32 to vector<16x1xf32>
    %14 = arith.mulf %9, %13 : vector<16x1xf32>
    %15 = arith.mulf %9, %14 : vector<16x1xf32>
    %16 = arith.subf %12, %15 : vector<16x1xf32>
    %cst_9 = arith.constant 1.990000e+02 : f32
    %17 = vector.broadcast %cst_9 : f32 to vector<16x1xf32>
    %18 = arith.divf %16, %17 : vector<16x1xf32>
    %cst_10 = arith.constant 0.000000e+00 : f32
    %19 = vector.broadcast %cst_10 : f32 to vector<16x1xf32>
    %20 = arith.maximumf %18, %19 : vector<16x1xf32>
    %21 = math.sqrt %20 : vector<16x1xf32>
    %cst_11 = arith.constant 9.99999997E-7 : f32
    %22 = vector.broadcast %cst_11 : f32 to vector<16x1xf32>
    %23 = arith.addf %21, %22 : vector<16x1xf32>
    %24 = tpu.reciprocal %23 {approx = true} : vector<16x1xf32> -> vector<16x1xf32>
    %25 = arith.mulf %23, %24 : vector<16x1xf32>
    %cst_12 = arith.constant 2.000000e+00 : f32
    %26 = vector.broadcast %cst_12 : f32 to vector<16x1xf32>
    %27 = arith.subf %26, %25 : vector<16x1xf32>
    %28 = arith.mulf %24, %27 : vector<16x1xf32>
    %c0_13 = arith.constant 0 : index
    %c0_14 = arith.constant 0 : index
    %29 = vector.load %arg6[%c0_13, %c0_14] : memref<256x128xf32, #tpu.memory_space<vmem>>, vector<256x128xf32>
    %cst_15 = arith.constant dense<0.000000e+00> : vector<16x128xf32>
    %30 = tpu.matmul %7, %29, %cst_15 {dimension_numbers = #tpu.dot_dimension_numbers<[1], [0], [0], [1], [0, 0, 1, 1], [], []>} : vector<16x256xf32>, vector<256x128xf32>, vector<16x128xf32> -> vector<16x128xf32>
    %c0_16 = arith.constant 0 : index
    %c0_17 = arith.constant 0 : index
    %31 = vector.load %arg4[%c0_16, %c0_17] : memref<1x128xf32, #tpu.memory_space<vmem>>, vector<1x128xf32>
    %32 = vector.broadcast %14 : vector<16x1xf32> to vector<16x128xf32>
    %33 = vector.broadcast %31 : vector<1x128xf32> to vector<16x128xf32>
    %34 = arith.mulf %32, %33 : vector<16x128xf32>
    %35 = arith.subf %30, %34 : vector<16x128xf32>
    %36 = vector.broadcast %28 : vector<16x1xf32> to vector<16x128xf32>
    %37 = arith.mulf %36, %35 : vector<16x128xf32>
    %c0_18 = arith.constant 0 : index
    %c0_19 = arith.constant 0 : index
    %38 = vector.load %arg5[%c0_18, %c0_19] : memref<1x128xf32, #tpu.memory_space<vmem>>, vector<1x128xf32>
    %39 = vector.broadcast %38 : vector<1x128xf32> to vector<16x128xf32>
    %40 = arith.addf %37, %39 : vector<16x128xf32>
    %c0_20 = arith.constant 0 : index
    %c0_21 = arith.constant 0 : index
    %41 = vector.load %arg7[%c0_20, %c0_21] : memref<16x128xf32, #tpu.memory_space<vmem>>, vector<16x128xf32>
    tpu.vector_store %arg7[%c0_20, %c0_21], %40 {strides = array<i32>} : memref<16x128xf32, #tpu.memory_space<vmem>>, vector<16x128xf32>,
    return
  }
  func.func @transform_0(%arg0: i32) -> (i32, i32) {
    %c0_i32 = arith.constant 0 : i32
    %c0_i32_0 = arith.constant 0 : i32
    return %arg0, %c0_i32 : i32, i32
  }
  func.func @transform_1(%arg0: i32) -> (i32, i32) {
    %c0_i32 = arith.constant 0 : i32
    %c0_i32_0 = arith.constant 0 : i32
    %c0_i32_1 = arith.constant 0 : i32
    return %c0_i32, %c0_i32_0 : i32, i32
  }
  func.func @transform_2(%arg0: i32) -> (i32, i32) {
    %c0_i32 = arith.constant 0 : i32
    %c0_i32_0 = arith.constant 0 : i32
    %c0_i32_1 = arith.constant 0 : i32
    return %c0_i32, %c0_i32_0 : i32, i32
  }
  func.func @transform_3(%arg0: i32) -> (i32, i32) {
    %c0_i32 = arith.constant 0 : i32
    %c0_i32_0 = arith.constant 0 : i32
    %c0_i32_1 = arith.constant 0 : i32
    return %c0_i32, %c0_i32_0 : i32, i32
  }
  func.func @transform_4(%arg0: i32) -> (i32, i32) {
    %c0_i32 = arith.constant 0 : i32
    %c0_i32_0 = arith.constant 0 : i32
    %c0_i32_1 = arith.constant 0 : i32
    return %c0_i32, %c0_i32_0 : i32, i32
  }
  func.func @transform_5(%arg0: i32) -> (i32, i32) {
    %c0_i32 = arith.constant 0 : i32
    %c0_i32_0 = arith.constant 0 : i32
    %c0_i32_1 = arith.constant 0 : i32
    return %c0_i32, %c0_i32_0 : i32, i32
  }
  func.func @transform_6(%arg0: i32) -> (i32, i32) {
    %c0_i32 = arith.constant 0 : i32
    %c0_i32_0 = arith.constant 0 : i32
    return %arg0, %c0_i32 : i32, i32
  }
}

</mosaic_0001>

<llo_original>
// kernel: tpu_custom_call.1
$region0: #{tpu_custom_call.1}
  #allocation0 [shape = 'u32[]', space=smem, size = 0x4, offset = 0x4, fixed_abs, tag = 'smem constant byte address 0x4 - core index']
  #allocation1 [shape = 'u32[144,128]{1,0:T(1,128)}', space=vmem, size = 0x12000, scoped, tag = 'internal scratch']
  %s0 = inlined_call_operand.hbm [shape: f32[16,128], index: 0, kind: input, shape index: {}]
  %s1 = inlined_call_operand.hbm [shape: f32[128,256], index: 1, kind: input, shape index: {}]
  %s2 = inlined_call_operand.hbm [shape: f32[1,256], index: 2, kind: input, shape index: {}]
  %s3 = inlined_call_operand.hbm [shape: f32[1,128], index: 3, kind: input, shape index: {}]
  %s4 = inlined_call_operand.hbm [shape: f32[1,128], index: 4, kind: input, shape index: {}]
  %s5 = inlined_call_operand.hbm [shape: f32[256,128], index: 5, kind: input, shape index: {}]
  %s6 = inlined_call_operand.hbm [shape: f32[16,128], index: 6, kind: output, shape index: {}]
  %s7 = sld [smem:[#allocation0]]
  $region58: #{tpu_custom_call.1} parent=0
    _
  %s9 = ssub.s32 1, %s7
  %s10 = scalar_select 0, %s9, %s7
  $region1: #{tpu_custom_call.1} parent=0
    #allocation2 [shape = 'u8[8192]{0}', space=vmem, size = 0x2000, scoped, tag = 'input window, operand 0, single buffered']
    #allocation3 [shape = 's32[1]{0}', space=sflag, size = 0x4, scoped, tag = 'scoped memory for tpu_custom_call.1']
    #allocation4 [shape = 's32[1]{0}', space=sflag, size = 0x4, scoped, tag = 'scoped memory for tpu_custom_call.1']
    #allocation5 [shape = 'u8[131072]{0}', space=vmem, size = 0x20000, scoped, tag = 'input window, operand 1, single buffered']
    #allocation6 [shape = 's32[1]{0}', space=sflag, size = 0x4, scoped, tag = 'scoped memory for tpu_custom_call.1']
    #allocation7 [shape = 'u8[1024]{0}', space=vmem, size = 0x400, scoped, tag = 'input window, operand 2, single buffered']
    #allocation8 [shape = 'u8[512]{0}', space=vmem, size = 0x400, scoped, tag = 'input window, operand 3, single buffered']
    #allocation9 [shape = 's32[1]{0}', space=sflag, size = 0x4, scoped, tag = 'scoped memory for tpu_custom_call.1']
    #allocation10 [shape = 'u8[512]{0}', space=vmem, size = 0x400, scoped, tag = 'input window, operand 4, single buffered']
    #allocation11 [shape = 'u8[131072]{0}', space=vmem, size = 0x20000, scoped, tag = 'input window, operand 5, single buffered']
    #allocation12 [shape = 's32[1]{0}', space=sflag, size = 0x4, scoped, tag = 'scoped memory for tpu_custom_call.1']
    #allocation13 [shape = 'u8[8192]{0}', space=vmem, size = 0x2000, scoped, tag = 'output window, operand 0, single buffered']
    %11 = vsyncpa [#allocation3], 0
    %12 = vsyncpa [#allocation6], 0
    %13 = vsyncpa [#allocation9], 0
    %14 = vsyncpa [#allocation12], 0
    %15 = vsyncpa [#allocation4], 0
    // Predicated region
    $region2: #{tpu_custom_call.1} parent=1 // pred_check
      _
    $region3: #{tpu_custom_call.1} parent=1 // pred_check_branch
      %17 = sbr.rel (0) target = $region5
    $region4: #{tpu_custom_call.1} parent=1 // pred_region
      %s19 = ssub.s32 256, 256
      %20 = vsyncadd [#allocation3], %s19
      %s21 = sshll.u32 [#allocation2], 4
      %s22 = int_to_ptr.vmem [resolvable:$true] %s21
      %27 = dma.hbm_to_vmem [thread:$0]  %s0, 256, %s22, [#allocation3], 128, 128, 8
    $region5: #{tpu_custom_call.1} parent=1 // pred_fallthru
      _
    // Predicated region
    $region6: #{tpu_custom_call.1} parent=1 // pred_check
      _
    $region7: #{tpu_custom_call.1} parent=1 // pred_check_branch
      %29 = sbr.rel (0) target = $region9
    $region8: #{tpu_custom_call.1} parent=1 // pred_region
      %s31 = ssub.s32 4096, 4096
      %32 = vsyncadd [#allocation6], %s31
      %s33 = sshll.u32 [#allocation5], 4
      %s34 = int_to_ptr.vmem [resolvable:$true] %s33
      %39 = dma.hbm_to_vmem [thread:$0]  %s1, 4096, %s34, [#allocation6], 256, 256, 16
    $region9: #{tpu_custom_call.1} parent=1 // pred_fallthru
      _
    // Predicated region
    $region10: #{tpu_custom_call.1} parent=1 // pred_check
      _
    $region11: #{tpu_custom_call.1} parent=1 // pred_check_branch
      %41 = sbr.rel (0) target = $region13
    $region12: #{tpu_custom_call.1} parent=1 // pred_region
      %s43 = ssub.s32 32, 32
      %44 = vsyncadd [#allocation6], %s43
      %s46 = sshll.u32 [#allocation7], 4
      %s47 = int_to_ptr.vmem [resolvable:$true] %s46
      %49 = dma.hbm_to_vmem [thread:$0]  %s2, 32, %s47, [#allocation6]
    $region13: #{tpu_custom_call.1} parent=1 // pred_fallthru
      _
    // Predicated region
    $region14: #{tpu_custom_call.1} parent=1 // pred_check
      _
    $region15: #{tpu_custom_call.1} parent=1 // pred_check_branch
      %51 = sbr.rel (0) target = $region17
    $region16: #{tpu_custom_call.1} parent=1 // pred_region
      %s53 = ssub.s32 16, 16
      %54 = vsyncadd [#allocation9], %s53
      %s56 = sshll.u32 [#allocation8], 4
      %s57 = int_to_ptr.vmem [resolvable:$true] %s56
      %59 = dma.hbm_to_vmem [thread:$0]  %s3, 16, %s57, [#allocation9]
    $region17: #{tpu_custom_call.1} parent=1 // pred_fallthru
      _
    // Predicated region
    $region18: #{tpu_custom_call.1} parent=1 // pred_check
      _
    $region19: #{tpu_custom_call.1} parent=1 // pred_check_branch
      %61 = sbr.rel (0) target = $region21
    $region20: #{tpu_custom_call.1} parent=1 // pred_region
      %s63 = ssub.s32 16, 16
      %64 = vsyncadd [#allocation9], %s63
      %s66 = sshll.u32 [#allocation10], 4
      %s67 = int_to_ptr.vmem [resolvable:$true] %s66
      %69 = dma.hbm_to_vmem [thread:$0]  %s4, 16, %s67, [#allocation9]
    $region21: #{tpu_custom_call.1} parent=1 // pred_fallthru
      _
    // Predicated region
    $region22: #{tpu_custom_call.1} parent=1 // pred_check
      _
    $region23: #{tpu_custom_call.1} parent=1 // pred_check_branch
      %71 = sbr.rel (0) target = $region25
    $region24: #{tpu_custom_call.1} parent=1 // pred_region
      %s73 = ssub.s32 4096, 4096
      %74 = vsyncadd [#allocation12], %s73
      %s75 = sshll.u32 [#allocation11], 4
      %s76 = int_to_ptr.vmem [resolvable:$true] %s75
      %81 = dma.hbm_to_vmem [thread:$0]  %s5, 4096, %s76, [#allocation12], 128, 128, 8
    $region25: #{tpu_custom_call.1} parent=1 // pred_fallthru
      _
    // Predicated region
    $region26: #{tpu_custom_call.1} parent=1 // pred_check
      _
    $region27: #{tpu_custom_call.1} parent=1 // pred_check_branch
      %83 = sbr.rel (0) target = $region29
    $region28: #{tpu_custom_call.1} parent=1 // pred_region
      %84 = dma.done [#allocation3], 256
    $region29: #{tpu_custom_call.1} parent=1 // pred_fallthru
      _
    // Predicated region
    $region30: #{tpu_custom_call.1} parent=1 // pred_check
      _
    $region31: #{tpu_custom_call.1} parent=1 // pred_check_branch
      %86 = sbr.rel (0) target = $region33
    $region32: #{tpu_custom_call.1} parent=1 // pred_region
      %87 = dma.done [#allocation6], 4096
    $region33: #{tpu_custom_call.1} parent=1 // pred_fallthru
      _
    // Predicated region
    $region34: #{tpu_custom_call.1} parent=1 // pred_check
      _
    $region35: #{tpu_custom_call.1} parent=1 // pred_check_branch
      %89 = sbr.rel (0) target = $region37
    $region36: #{tpu_custom_call.1} parent=1 // pred_region
      %90 = dma.done [#allocation6], 32
    $region37: #{tpu_custom_call.1} parent=1 // pred_fallthru
      _
    // Predicated region
    $region38: #{tpu_custom_call.1} parent=1 // pred_check
      _
    $region39: #{tpu_custom_call.1} parent=1 // pred_check_branch
      %92 = sbr.rel (0) target = $region41
    $region40: #{tpu_custom_call.1} parent=1 // pred_region
      %93 = dma.done [#allocation9], 16
    $region41: #{tpu_custom_call.1} parent=1 // pred_fallthru
      _
    // Predicated region
    $region42: #{tpu_custom_call.1} parent=1 // pred_check
      _
    $region43: #{tpu_custom_call.1} parent=1 // pred_check_branch
      %95 = sbr.rel (0) target = $region45
    $region44: #{tpu_custom_call.1} parent=1 // pred_region
      %96 = dma.done [#allocation9], 16
    $region45: #{tpu_custom_call.1} parent=1 // pred_fallthru
      _
    // Predicated region
    $region46: #{tpu_custom_call.1} parent=1 // pred_check
      _
    $region47: #{tpu_custom_call.1} parent=1 // pred_check_branch
      %98 = sbr.rel (0) target = $region49
    $region48: #{tpu_custom_call.1} parent=1 // pred_region
      %99 = dma.done [#allocation12], 4096
    $region49: #{tpu_custom_call.1} parent=1 // pred_fallthru
      _
    %v100 = vld [vmem:[#allocation2] sm:$0xff]
    %v101 = vld [vmem:[#allocation2 + $0x8] sm:$0xff]
    %v102 = vld [vmem:[#allocation5] sm:$0xff]
    %v103 = vld [vmem:[#allocation5 + $0x8] sm:$0xff]
    %v104 = vld [vmem:[#allocation5 + $0x10] sm:$0xff]
    %v105 = vld [vmem:[#allocation5 + $0x18] sm:$0xff]
    %v106 = vld [vmem:[#allocation5 + $0x20] sm:$0xff]
    %v107 = vld [vmem:[#allocation5 + $0x28] sm:$0xff]
    %v108 = vld [vmem:[#allocation5 + $0x30] sm:$0xff]
    %v109 = vld [vmem:[#allocation5 + $0x38] sm:$0xff]
    %v110 = vld [vmem:[#allocation5 + $0x40] sm:$0xff]
    %v111 = vld [vmem:[#allocation5 + $0x48] sm:$0xff]
    %v112 = vld [vmem:[#allocation5 + $0x50] sm:$0xff]
    %v113 = vld [vmem:[#allocation5 + $0x58] sm:$0xff]
    %v114 = vld [vmem:[#allocation5 + $0x60] sm:$0xff]
    %v115 = vld [vmem:[#allocation5 + $0x68] sm:$0xff]
    %v116 = vld [vmem:[#allocation5 + $0x70] sm:$0xff]
    %v117 = vld [vmem:[#allocation5 + $0x78] sm:$0xff]
    %v118 = vld [vmem:[#allocation5 + $0x80] sm:$0xff]
    %v119 = vld [vmem:[#allocation5 + $0x88] sm:$0xff]
    %v120 = vld [vmem:[#allocation5 + $0x90] sm:$0xff]
    %v121 = vld [vmem:[#allocation5 + $0x98] sm:$0xff]
    %v122 = vld [vmem:[#allocation5 + $0xa0] sm:$0xff]
    %v123 = vld [vmem:[#allocation5 + $0xa8] sm:$0xff]
    %v124 = vld [vmem:[#allocation5 + $0xb0] sm:$0xff]
    %v125 = vld [vmem:[#allocation5 + $0xb8] sm:$0xff]
    %v126 = vld [vmem:[#allocation5 + $0xc0] sm:$0xff]
    %v127 = vld [vmem:[#allocation5 + $0xc8] sm:$0xff]
    %v128 = vld [vmem:[#allocation5 + $0xd0] sm:$0xff]
    %v129 = vld [vmem:[#allocation5 + $0xd8] sm:$0xff]
    %v130 = vld [vmem:[#allocation5 + $0xe0] sm:$0xff]
    %v131 = vld [vmem:[#allocation5 + $0xe8] sm:$0xff]
    %v132 = vld [vmem:[#allocation5 + $0xf0] sm:$0xff]
    %v133 = vld [vmem:[#allocation5 + $0xf8] sm:$0xff]
    %v134 = vld [vmem:[#allocation7] sm:$0x3]
    %v136 = vlaneseq
    %v137 = vshrl.u32 %v136, 7
    %v138 = vsub.s32 0, %v137
    %v139 = vrot.slane %v134, %v138
    %v140 = vlaneseq
    %v141 = vshrl.u32 %v140, 7
    %v142 = vsub.s32 1, %v141
    %v143 = vrot.slane %v134, %v142
    %146 = vmatprep.subr.mxu0 %v103
    %147 = vmatpush1.msra.mxu0 %v102
    %148 = vmatprep.subr.mxu0 %v105
    %149 = vmatpush1.msra.mxu0 %v104
    %150 = vmatprep.subr.mxu0 %v107
    %151 = vmatpush1.msra.mxu0 %v106
    %152 = vmatprep.subr.mxu0 %v109
    %153 = vmatpush1.msra.mxu0 %v108
    %154 = vmatprep.subr.mxu0 %v111
    %155 = vmatpush1.msra.mxu0 %v110
    %156 = vmatprep.subr.mxu0 %v113
    %157 = vmatpush1.msra.mxu0 %v112
    %158 = vmatprep.subr.mxu0 %v115
    %159 = vmatpush1.msra.mxu0 %v114
    %160 = vmatprep.subr.mxu0 %v117
    %161 = vmatpush1.msra.mxu0 %v116
    %162 = vmatprep.subr.mxu0 %v119
    %163 = vmatpush1.msra.mxu0 %v118
    %164 = vmatprep.subr.mxu0 %v121
    %165 = vmatpush1.msra.mxu0 %v120
    %166 = vmatprep.subr.mxu0 %v123
    %167 = vmatpush1.msra.mxu0 %v122
    %168 = vmatprep.subr.mxu0 %v125
    %169 = vmatpush1.msra.mxu0 %v124
    %170 = vmatprep.subr.mxu0 %v127
    %171 = vmatpush1.msra.mxu0 %v126
    %172 = vmatprep.subr.mxu0 %v129
    %173 = vmatpush1.msra.mxu0 %v128
    %174 = vmatprep.subr.mxu0 %v131
    %175 = vmatpush1.msra.mxu0 %v130
    %176 = vmatprep.subr.mxu0 %v133
    %177 = vmatpush1.msra.mxu0 %v132
    %178 = vmatprep.subr.mxu0 0.0
    %179 = vmatpush1.msra.mxu0 0.0
    %180 = vmatprep.subr.mxu0 0.0
    %181 = vmatpush1.msra.mxu0 0.0
    %182 = vmatprep.subr.mxu0 0.0
    %183 = vmatpush1.msra.mxu0 0.0
    %184 = vmatprep.subr.mxu0 0.0
    %185 = vmatpush1.msra.mxu0 0.0
    %186 = vmatprep.subr.mxu0 0.0
    %187 = vmatpush1.msra.mxu0 0.0
    %188 = vmatprep.subr.mxu0 0.0
    %189 = vmatpush1.msra.mxu0 0.0
    %190 = vmatprep.subr.mxu0 0.0
    %191 = vmatpush1.msra.mxu0 0.0
    %192 = vmatprep.subr.mxu0 0.0
    %193 = vmatpush1.msra.mxu0 0.0
    %194 = vmatprep.subr.mxu0 0.0
    %195 = vmatpush1.msra.mxu0 0.0
    %196 = vmatprep.subr.mxu0 0.0
    %197 = vmatpush1.msra.mxu0 0.0
    %198 = vmatprep.subr.mxu0 0.0
    %199 = vmatpush1.msra.mxu0 0.0
    %200 = vmatprep.subr.mxu0 0.0
    %201 = vmatpush1.msra.mxu0 0.0
    %202 = vmatprep.subr.mxu0 0.0
    %203 = vmatpush1.msra.mxu0 0.0
    %204 = vmatprep.subr.mxu0 0.0
    %205 = vmatpush1.msra.mxu0 0.0
    %206 = vmatprep.subr.mxu0 0.0
    %207 = vmatpush1.msra.mxu0 0.0
    %208 = vmatprep.subr.mxu0 0.0
    %209 = vmatpush1.msra.mxu0 0.0
    %210 = vmatprep.mubr.f32.mxu0 0.0
    %211 = vmatmul.mubr.f32.gmra.mrb[0].mxu0 %v100
    %v212 = vpop.f32.mrb[0].mxu0
    %v213 = vadd.f32 %v139, %v212
    %v214 = vpop.f32.mrb[0].mxu0
    %v215 = vadd.f32 %v143, %v214
    %216 = vmatprep.mubr.f32.mxu0 0.0
    %217 = vmatmul.mubr.f32.gmra.mrb[0].mxu0 %v101
    %v218 = vpop.f32.mrb[0].mxu0
    %v219 = vadd.f32 %v139, %v218
    %v220 = vpop.f32.mrb[0].mxu0
    %v221 = vadd.f32 %v143, %v220
    %222 = vdwg.mxu0
    %v223 = vmax.f32 %v213, 0.0
    %v224 = vmax.f32 %v215, 0.0
    %v225 = vmax.f32 %v219, 0.0
    %v226 = vmax.f32 %v221, 0.0
    %v227 = vadd.f32 %v223, %v224
    %228 = vadd.xlane.f32.xlu0 %v227
    %v229 = vpop.xlane.xlu0 %228
    %v230 = vadd.f32 %v225, %v226
    %231 = vadd.xlane.f32.xlu0 %v230
    %v232 = vpop.xlane.xlu0 %231
    %v233 = vmul.f32 %v223, %v223
    %v234 = vmul.f32 %v224, %v224
    %v235 = vmul.f32 %v225, %v225
    %v236 = vmul.f32 %v226, %v226
    %v237 = vadd.f32 %v233, %v234
    %238 = vadd.xlane.f32.xlu0 %v237
    %v239 = vpop.xlane.xlu0 %238
    %v240 = vadd.f32 %v235, %v236
    %241 = vadd.xlane.f32.xlu0 %v240
    %v242 = vpop.xlane.xlu0 %241
    %v243 = vmul.f32 %v229, 0.005
    %v244 = vmul.f32 %v232, 0.005
    %v245 = vmul.f32 %v229, %v243
    %v246 = vmul.f32 %v232, %v244
    %v247 = vsub.f32 %v239, %v245
    %v248 = vsub.f32 %v242, %v246
    %v249 = vrcp.pop 199.0
    %v250 = vmul.f32 %v247, %v249
    %v251 = vmul.f32 %v248, %v249
    %v252 = vmax.f32 %v250, 0.0
    %v253 = vmax.f32 %v251, 0.0
    %v254 = vrsqrt.pop %v252
    %v255 = vmul.f32 %v252, %v254
    %vm256 = vcmp.eq.f32.partialorder %v252, inf
    %v257 = vsel %vm256, %v252, %v255
    %vm258 = vcmp.eq.f32.partialorder %v252, 0.0
    %v259 = vand.u32 %v252, 2147483648
    %v260 = vsel %vm258, %v259, %v257
    %v261 = vrsqrt.pop %v253
    %v262 = vmul.f32 %v253, %v261
    %vm263 = vcmp.eq.f32.partialorder %v253, inf
    %v264 = vsel %vm263, %v253, %v262
    %vm265 = vcmp.eq.f32.partialorder %v253, 0.0
    %v266 = vand.u32 %v253, 2147483648
    %v267 = vsel %vm265, %v266, %v264
    %v268 = vadd.f32 %v260, 1e-06
    %v269 = vadd.f32 %v267, 1e-06
    %v270 = vrcp.pop %v268
    %v271 = vrcp.pop %v269
    %v272 = vmul.f32 %v268, %v270
    %v273 = vmul.f32 %v269, %v271
    %v274 = vsub.f32 2.0, %v272
    %v275 = vsub.f32 2.0, %v273
    %v276 = vmul.f32 %v270, %v274
    %v277 = vmul.f32 %v271, %v275
    %v278 = vld [vmem:[#allocation11] sm:$0xff]
    %v279 = vld [vmem:[#allocation11 + $0x8] sm:$0xff]
    %v280 = vld [vmem:[#allocation11 + $0x10] sm:$0xff]
    %v281 = vld [vmem:[#allocation11 + $0x18] sm:$0xff]
    %v282 = vld [vmem:[#allocation11 + $0x20] sm:$0xff]
    %v283 = vld [vmem:[#allocation11 + $0x28] sm:$0xff]
    %v284 = vld [vmem:[#allocation11 + $0x30] sm:$0xff]
    %v285 = vld [vmem:[#allocation11 + $0x38] sm:$0xff]
    %v286 = vld [vmem:[#allocation11 + $0x40] sm:$0xff]
    %v287 = vld [vmem:[#allocation11 + $0x48] sm:$0xff]
    %v288 = vld [vmem:[#allocation11 + $0x50] sm:$0xff]
    %v289 = vld [vmem:[#allocation11 + $0x58] sm:$0xff]
    %v290 = vld [vmem:[#allocation11 + $0x60] sm:$0xff]
    %v291 = vld [vmem:[#allocation11 + $0x68] sm:$0xff]
    %v292 = vld [vmem:[#allocation11 + $0x70] sm:$0xff]
    %v293 = vld [vmem:[#allocation11 + $0x78] sm:$0xff]
    %v294 = vld [vmem:[#allocation11 + $0x80] sm:$0xff]
    %v295 = vld [vmem:[#allocation11 + $0x88] sm:$0xff]
    %v296 = vld [vmem:[#allocation11 + $0x90] sm:$0xff]
    %v297 = vld [vmem:[#allocation11 + $0x98] sm:$0xff]
    %v298 = vld [vmem:[#allocation11 + $0xa0] sm:$0xff]
    %v299 = vld [vmem:[#allocation11 + $0xa8] sm:$0xff]
    %v300 = vld [vmem:[#allocation11 + $0xb0] sm:$0xff]
    %v301 = vld [vmem:[#allocation11 + $0xb8] sm:$0xff]
    %v302 = vld [vmem:[#allocation11 + $0xc0] sm:$0xff]
    %v303 = vld [vmem:[#allocation11 + $0xc8] sm:$0xff]
    %v304 = vld [vmem:[#allocation11 + $0xd0] sm:$0xff]
    %v305 = vld [vmem:[#allocation11 + $0xd8] sm:$0xff]
    %v306 = vld [vmem:[#allocation11 + $0xe0] sm:$0xff]
    %v307 = vld [vmem:[#allocation11 + $0xe8] sm:$0xff]
    %v308 = vld [vmem:[#allocation11 + $0xf0] sm:$0xff]
    %v309 = vld [vmem:[#allocation11 + $0xf8] sm:$0xff]
    %310 = vmatprep.subr.mxu0 0.0
    %311 = vmatpush1.msra.mxu0 %v278
    %312 = vmatprep.subr.mxu0 0.0
    %313 = vmatpush1.msra.mxu0 %v279
    %314 = vmatprep.subr.mxu0 0.0
    %315 = vmatpush1.msra.mxu0 %v280
    %316 = vmatprep.subr.mxu0 0.0
    %317 = vmatpush1.msra.mxu0 %v281
    %318 = vmatprep.subr.mxu0 0.0
    %319 = vmatpush1.msra.mxu0 %v282
    %320 = vmatprep.subr.mxu0 0.0
    %321 = vmatpush1.msra.mxu0 %v283
    %322 = vmatprep.subr.mxu0 0.0
    %323 = vmatpush1.msra.mxu0 %v284
    %324 = vmatprep.subr.mxu0 0.0
    %325 = vmatpush1.msra.mxu0 %v285
    %326 = vmatprep.subr.mxu0 0.0
    %327 = vmatpush1.msra.mxu0 %v286
    %328 = vmatprep.subr.mxu0 0.0
    %329 = vmatpush1.msra.mxu0 %v287
    %330 = vmatprep.subr.mxu0 0.0
    %331 = vmatpush1.msra.mxu0 %v288
    %332 = vmatprep.subr.mxu0 0.0
    %333 = vmatpush1.msra.mxu0 %v289
    %334 = vmatprep.subr.mxu0 0.0
    %335 = vmatpush1.msra.mxu0 %v290
    %336 = vmatprep.subr.mxu0 0.0
    %337 = vmatpush1.msra.mxu0 %v291
    %338 = vmatprep.subr.mxu0 0.0
    %339 = vmatpush1.msra.mxu0 %v292
    %340 = vmatprep.subr.mxu0 0.0
    %341 = vmatpush1.msra.mxu0 %v293
    %342 = vmatprep.subr.mxu0 0.0
    %343 = vmatpush1.msra.mxu0 %v294
    %344 = vmatprep.subr.mxu0 0.0
    %345 = vmatpush1.msra.mxu0 %v295
    %346 = vmatprep.subr.mxu0 0.0
    %347 = vmatpush1.msra.mxu0 %v296
    %348 = vmatprep.subr.mxu0 0.0
    %349 = vmatpush1.msra.mxu0 %v297
    %350 = vmatprep.subr.mxu0 0.0
    %351 = vmatpush1.msra.mxu0 %v298
    %352 = vmatprep.subr.mxu0 0.0
    %353 = vmatpush1.msra.mxu0 %v299
    %354 = vmatprep.subr.mxu0 0.0
    %355 = vmatpush1.msra.mxu0 %v300
    %356 = vmatprep.subr.mxu0 0.0
    %357 = vmatpush1.msra.mxu0 %v301
    %358 = vmatprep.subr.mxu0 0.0
    %359 = vmatpush1.msra.mxu0 %v302
    %360 = vmatprep.subr.mxu0 0.0
    %361 = vmatpush1.msra.mxu0 %v303
    %362 = vmatprep.subr.mxu0 0.0
    %363 = vmatpush1.msra.mxu0 %v304
    %364 = vmatprep.subr.mxu0 0.0
    %365 = vmatpush1.msra.mxu0 %v305
    %366 = vmatprep.subr.mxu0 0.0
    %367 = vmatpush1.msra.mxu0 %v306
    %368 = vmatprep.subr.mxu0 0.0
    %369 = vmatpush1.msra.mxu0 %v307
    %370 = vmatprep.subr.mxu0 0.0
    %371 = vmatpush1.msra.mxu0 %v308
    %372 = vmatprep.subr.mxu0 0.0
    %373 = vmatpush1.msra.mxu0 %v309
    %374 = vmatprep.mubr.f32.mxu0 %v224
    %375 = vmatmul.mubr.f32.gmra.mrb[0].mxu0 %v223
    %v376 = vpop.f32.mrb[0].mxu0
    %v377 = vadd.f32 0.0, %v376
    %v378 = vpop.f32.mrb[0].mxu0
    %379 = vmatprep.mubr.f32.mxu0 %v226
    %380 = vmatmul.mubr.f32.gmra.mrb[0].mxu0 %v225
    %v381 = vpop.f32.mrb[0].mxu0
    %v382 = vadd.f32 0.0, %v381
    %v383 = vpop.f32.mrb[0].mxu0
    %384 = vdwg.mxu0
    %v385 = vld [vmem:[#allocation8] sm:$0x1]
    %v387 = vlaneseq
    %v388 = vshrl.u32 %v387, 7
    %v389 = vsub.s32 0, %v388
    %v390 = vrot.slane %v385, %v389
    %v392 = vmul.f32 %v243, %v390
    %v393 = vmul.f32 %v244, %v390
    %v394 = vsub.f32 %v377, %v392
    %v395 = vsub.f32 %v382, %v393
    %v396 = vmul.f32 %v276, %v394
    %v397 = vmul.f32 %v277, %v395
    %v398 = vld [vmem:[#allocation10] sm:$0x1]
    %v400 = vlaneseq
    %v401 = vshrl.u32 %v400, 7
    %v402 = vsub.s32 0, %v401
    %v403 = vrot.slane %v398, %v402
    %v405 = vadd.f32 %v396, %v403
    %v406 = vadd.f32 %v397, %v403
    %407 = vst [vmem:[#allocation13] sm:$0xff] %v405
    %408 = vst [vmem:[#allocation13 + $0x8] sm:$0xff] %v406
    // Predicated region
    $region50: #{tpu_custom_call.1} parent=1 // pred_check
      _
    $region51: #{tpu_custom_call.1} parent=1 // pred_check_branch
      %410 = sbr.rel (0) target = $region53
    $region52: #{tpu_custom_call.1} parent=1 // pred_region
      %s412 = ssub.s32 256, 256
      %413 = vsyncadd [#allocation4], %s412
      %s414 = sshll.u32 [#allocation13], 4
      %s415 = int_to_ptr.vmem [resolvable:$true] %s414
      %420 = dma.vmem_to_hbm [thread:$0]  %s415, 256, %s6, [#allocation4], 128, 128, 8
    $region53: #{tpu_custom_call.1} parent=1 // pred_fallthru
      _
    // Predicated region
    $region54: #{tpu_custom_call.1} parent=1 // pred_check
      _
    $region55: #{tpu_custom_call.1} parent=1 // pred_check_branch
      %422 = sbr.rel (0) target = $region57
    $region56: #{tpu_custom_call.1} parent=1 // pred_region
      %423 = dma.done [#allocation4], 256
    $region57: #{tpu_custom_call.1} parent=1 // pred_fallthru
      _
    %424 = vsyncpa [#allocation3], 1
    %425 = vsyncpa [#allocation6], 1
    %426 = vsyncpa [#allocation9], 1
    %427 = vsyncpa [#allocation12], 1
    %428 = vsyncpa [#allocation4], 1

</llo_original>
